<compile_context>
chip_gen: v6e
topology: v6e:2x2x1
jax: 0.10.0
libtpu: 0.0.40
codegen_flags: <defaults>
</compile_context>

<pallas_src>
import functools

import jax
import jax.numpy as jnp
from jax import lax
from jax.experimental import pallas as pl
from jax.experimental.pallas import tpu as pltpu


def _cdiv(a, b):
    return (a + b - 1) // b


def _cond_patch_kernel(x_ref, w_ref, b_ref, o_ref, *, compute_dtype):
    """One grid step.

    x_ref: (TB, CV, TNl, Pl)  natural input layout (CV = C * n_var)
    w_ref: (CV, D, Pl)        torch weight rows regrouped per (c, v) slab
    b_ref: (D, 1)             f32 bias
    o_ref: (TB, D, TNl)       final output layout (no post-kernel transpose)
    """
    TB = x_ref.shape[0]
    CV = x_ref.shape[1]
    bias = b_ref[...]                                    # (D, 1) broadcasts over TNl
    for tb in range(TB):
        acc = None
        for cv in range(CV):
            xs = x_ref[tb, cv]                           # (TNl, Pl)
            ws = w_ref[cv]                               # (D, Pl)
            if compute_dtype is not None:
                xs = xs.astype(compute_dtype)            # in-kernel cast (no HBM pass)
            # y[d, nl] += sum_p ws[d, p] * xs[nl, p]   (A @ B.T form: the tiny
            # weight streams through the MXU; x is the stationary side, so the
            # large operand is not re-streamed once per (c, v)).
            part = lax.dot_general(
                ws, xs,
                (((1,), (1,)), ((), ())),
                preferred_element_type=jnp.float32,
            )                                            # (D, TNl), f32 accum
            acc = part if acc is None else acc + part
        o_ref[tb] = (acc + bias).astype(o_ref.dtype)


def cond_patch_embedding(x_in, weight, bias, *, L_patch_len,
                         compute_dtype=None, out_dtype=None, block_rows=1024):
    """CondPatchEmbedding forward.

    x_in:   (B, C, n_var, L)
    weight: (in_features, d_model) == torch Linear weight transposed,
            in_features = L_patch_len * n_var * C
    bias:   (d_model,)
    compute_dtype: None (keep input dtype) or jnp.bfloat16 (f32 accumulation).
    Returns (B, d_model, 1, Nl).
    """
    B, C, n_var, L = x_in.shape
    Pl = L_patch_len
    F, D = weight.shape
    assert F == Pl * n_var * C, "weight rows must equal L_patch_len * n_var * C"

    # --- replication padding on the ragged path (only the tail actually used) ---
    if L % Pl:
        Nl = L // Pl + 1
        x = jnp.pad(x_in, ((0, 0), (0, 0), (0, 0), (0, Nl * Pl - L)), mode="edge")
        # TODO(synk): fold the ragged tail into an in-kernel clamped-index DMA
        # gather to avoid this extra HBM pass on the non-divisible-L path.
    else:
        Nl = L // Pl
        x = x_in

    # unfold(dim=3, size=Pl, step=Pl) as a metadata-only view: (B, C*n_var, Nl, Pl)
    CV = C * n_var
    x = x.reshape(B, CV, Nl, Pl)

    # Torch feature order is f = (p*n_var + v)*C + c.  Regroup the (tiny) weight
    # once so the kernel contracts each (c, v) slab over p:  w[cv, d, p].
    w = jnp.transpose(weight.reshape(Pl, n_var, C, D), (2, 1, 3, 0)).reshape(CV, D, Pl)
    if compute_dtype is not None:
        w = w.astype(compute_dtype)
    b2 = bias.reshape(D, 1).astype(jnp.float32)

    if out_dtype is None:
        out_dtype = x_in.dtype

    # --- tile selection ---------------------------------------------------------
    # VMEM per Nl row of one x block: Pl sits on lanes (padded to 128) plus the
    # f32 accumulator / output row.  Budget per pipeline buffer keeps the
    # double-buffered working set well inside v7x's 32 MiB scoped VMEM.
    itemsize = jnp.dtype(x.dtype).itemsize
    row_bytes = CV * 128 * itemsize + D * 4
    max_rows = max(8, min(block_rows, (4 * 1024 * 1024) // row_bytes))
    unroll_cap = max(1, 64 // CV)            # bound the unrolled (tb, cv) dot loop

    if Nl > max_rows:
        tb = 1
        # multiple of 128 -> lane-dense (unmasked) output stores
        tnl = (max_rows // 128) * 128 if max_rows >= 128 else (max_rows // 8) * 8
    else:
        tnl = Nl                              # full extent (always legal)
        tb = max(1, min(B, max_rows // max(Nl, 1), unroll_cap))
        if B >= 2:
            tb = min(tb, _cdiv(B, 2))         # keep >= 2 grid steps for v7x megacore
        elif Nl >= 16:
            tnl = min(Nl, _cdiv(_cdiv(Nl, 2), 8) * 8)   # B == 1: split Nl instead

    grid = (_cdiv(B, tb), _cdiv(Nl, tnl))

    out = pl.pallas_call(
        functools.partial(_cond_patch_kernel, compute_dtype=compute_dtype),
        out_shape=jax.ShapeDtypeStruct((B, D, Nl), out_dtype),
        grid_spec=pltpu.PrefetchScalarGridSpec(
            num_scalar_prefetch=0,
            grid=grid,
            in_specs=[
                # streamed x tiles, natural layout (each (c,v) run contiguous in HBM)
                pl.BlockSpec((tb, CV, tnl, Pl), lambda b, i: (b, 0, i, 0)),
                # VMEM-resident regrouped weight and bias
                pl.BlockSpec((CV, D, Pl), lambda b, i: (0, 0, 0)),
                pl.BlockSpec((D, 1), lambda b, i: (0, 0)),
            ],
            out_specs=pl.BlockSpec((tb, D, tnl), lambda b, i: (b, 0, i)),
        ),
        compiler_params=pltpu.CompilerParams(
            # Independent tiles -> megacore sharding on v7x (no-op on v5e/v6e).
            dimension_semantics=("parallel", "parallel"),
            vmem_limit_bytes=32 * 1024 * 1024,
        ),
    )(x, w, b2)

    # (B, D, Nl) -> (B, D, 1, Nl): metadata-only reshape (no extra HBM pass).
    return out.reshape(B, D, 1, Nl)


cond_patch_embedding_jit = jax.jit(
    cond_patch_embedding,
    static_argnames=("L_patch_len", "compute_dtype", "out_dtype", "block_rows"),
)


def _reference(x_in, weight, bias, L_patch_len):
    # Pure-JAX mirror of the PyTorch forward (correctness check).
    B, C, n_var, L = x_in.shape
    Pl = L_patch_len
    if L % Pl:
        x = jnp.concatenate([x_in, jnp.repeat(x_in[..., -1:], Pl, axis=-1)], axis=-1)
    else:
        x = x_in
    Nl = (x.shape[-1] - Pl) // Pl + 1
    x = x[..., : Nl * Pl].reshape(B, C, n_var, Nl, Pl)
    x = jnp.transpose(x, (0, 3, 4, 2, 1)).reshape(B, 1, Nl, Pl * n_var * C)
    y = x @ weight + bias
    return jnp.transpose(y, (0, 3, 1, 2))


if __name__ == "__main__":
    # Module hyperparameters (channels == n_var * C so Linear in_features matches).
    L_patch_len = 4
    C = 2
    n_var = 4
    channels = n_var * C                 # = 8
    d_model = 32
    in_features = L_patch_len * channels  # = 32

    key = jax.random.PRNGKey(0)
    kx1, kx2, kx3, kx4, kw, kb = jax.random.split(key, 6)
    bound = 1.0 / (in_features ** 0.5)    # PyTorch Linear default init range

    # stored as (in_features, d_model) == torch weight transposed
    weight = jax.random.uniform(kw, (in_features, d_model), jnp.float32, -bound, bound)
    bias = jax.random.uniform(kb, (d_model,), jnp.float32, -bound, bound)

    def check(x_in, atol, rtol, **kwargs):
        out = jax.block_until_ready(
            cond_patch_embedding_jit(x_in, weight, bias,
                                     L_patch_len=L_patch_len, **kwargs))
        ref = _reference(x_in, weight, bias, L_patch_len)
        assert out.shape == ref.shape, (out.shape, ref.shape)
        err = float(jnp.max(jnp.abs(out - ref)))
        assert jnp.allclose(out, ref, atol=atol, rtol=rtol), f"max abs err {err}"
        return out

    # 1) ragged L (replication-padded tail), small Nl -> full-extent Nl tile
    x1 = jax.random.normal(kx1, (2, C, n_var, 14), jnp.float32)
    o1 = check(x1, 1e-5, 1e-4)
    assert o1.shape == (2, d_model, 1, 14 // L_patch_len + 1), o1.shape

    # 2) divisible L (no padding path)
    x2 = jax.random.normal(kx2, (2, C, n_var, 16), jnp.float32)
    o2 = check(x2, 1e-5, 1e-4)
    assert o2.shape == (2, d_model, 1, 4), o2.shape

    # 3) larger batch -> exercises the batch-tiled (TB > 1) path
    x3 = jax.random.normal(kx3, (8, C, n_var, 16), jnp.float32)
    check(x3, 1e-5, 1e-4)

    # 4) long ragged sequence -> exercises Nl tiling with a partial last tile
    x4 = jax.random.normal(kx4, (1, C, n_var, 5001), jnp.float32)
    check(x4, 2e-5, 1e-4)

    # 5) bf16 compute path (in-kernel cast, f32 MXU accumulation; valid on all gens)
    check(x1, 5e-2, 5e-2, compute_dtype=jnp.bfloat16)

    print("KERNEL_OK")
</pallas_src>

<mosaic_0001>
module attributes {stable_mosaic.version = 11 : i64} {
  func.func @_cond_patch_kernel(%arg0: i32, %arg1: i32, %arg2: memref<1x8x4x4xf32, #tpu.memory_space<vmem>>, %arg3: memref<8x32x4xf32, #tpu.memory_space<vmem>>, %arg4: memref<32x1xf32, #tpu.memory_space<vmem>>, %arg5: memref<1x32x4xf32, #tpu.memory_space<vmem>>) attributes {dimension_semantics = [#tpu.dimension_semantics<parallel>, #tpu.dimension_semantics<parallel>], iteration_bounds = array<i64: 2, 1>, scalar_prefetch = 0 : i64, scratch_operands = 0 : i64, tpu.core_type = #tpu.core_type<tc>, window_params = [{transform_indices = @transform_0, window_bounds = array<i64: 1, 8, 4, 4>}, {pipeline_mode = #tpu.pipeline_mode<synchronous>, transform_indices = @transform_1, window_bounds = array<i64: 8, 32, 4>}, {pipeline_mode = #tpu.pipeline_mode<synchronous>, transform_indices = @transform_2, window_bounds = array<i64: 32, 1>}, {transform_indices = @transform_3, window_bounds = array<i64: 1, 32, 4>}]} {
    %c0 = arith.constant 0 : index
    %c0_0 = arith.constant 0 : index
    %0 = vector.load %arg4[%c0, %c0_0] : memref<32x1xf32, #tpu.memory_space<vmem>>, vector<32x1xf32>
    %c0_1 = arith.constant 0 : index
    %c0_2 = arith.constant 0 : index
    %c0_3 = arith.constant 0 : index
    %c0_4 = arith.constant 0 : index
    %1 = vector.load %arg2[%c0_1, %c0_2, %c0_3, %c0_4] : memref<1x8x4x4xf32, #tpu.memory_space<vmem>>, vector<1x1x4x4xf32>
    %2 = vector.shape_cast %1 : vector<1x1x4x4xf32> to vector<4x4xf32>
    %c0_5 = arith.constant 0 : index
    %c0_6 = arith.constant 0 : index
    %c0_7 = arith.constant 0 : index
    %3 = vector.load %arg3[%c0_5, %c0_6, %c0_7] : memref<8x32x4xf32, #tpu.memory_space<vmem>>, vector<1x32x4xf32>
    %4 = vector.shape_cast %3 : vector<1x32x4xf32> to vector<32x4xf32>
    %cst = arith.constant dense<0.000000e+00> : vector<32x4xf32>
    %5 = tpu.matmul %4, %2, %cst {dimension_numbers = #tpu.dot_dimension_numbers<[1], [1], [0], [0], [0, 0, 1, 0], [], []>} : vector<32x4xf32>, vector<4x4xf32>, vector<32x4xf32> -> vector<32x4xf32>
    %c0_8 = arith.constant 0 : index
    %c1 = arith.constant 1 : index
    %c0_9 = arith.constant 0 : index
    %c0_10 = arith.constant 0 : index
    %6 = vector.load %arg2[%c0_8, %c1, %c0_9, %c0_10] : memref<1x8x4x4xf32, #tpu.memory_space<vmem>>, vector<1x1x4x4xf32>
    %7 = vector.shape_cast %6 : vector<1x1x4x4xf32> to vector<4x4xf32>
    %c1_11 = arith.constant 1 : index
    %c0_12 = arith.constant 0 : index
    %c0_13 = arith.constant 0 : index
    %8 = vector.load %arg3[%c1_11, %c0_12, %c0_13] : memref<8x32x4xf32, #tpu.memory_space<vmem>>, vector<1x32x4xf32>
    %9 = vector.shape_cast %8 : vector<1x32x4xf32> to vector<32x4xf32>
    %cst_14 = arith.constant dense<0.000000e+00> : vector<32x4xf32>
    %10 = tpu.matmul %9, %7, %cst_14 {dimension_numbers = #tpu.dot_dimension_numbers<[1], [1], [0], [0], [0, 0, 1, 0], [], []>} : vector<32x4xf32>, vector<4x4xf32>, vector<32x4xf32> -> vector<32x4xf32>
    %11 = arith.addf %5, %10 : vector<32x4xf32>
    %c0_15 = arith.constant 0 : index
    %c2 = arith.constant 2 : index
    %c0_16 = arith.constant 0 : index
    %c0_17 = arith.constant 0 : index
    %12 = vector.load %arg2[%c0_15, %c2, %c0_16, %c0_17] : memref<1x8x4x4xf32, #tpu.memory_space<vmem>>, vector<1x1x4x4xf32>
    %13 = vector.shape_cast %12 : vector<1x1x4x4xf32> to vector<4x4xf32>
    %c2_18 = arith.constant 2 : index
    %c0_19 = arith.constant 0 : index
    %c0_20 = arith.constant 0 : index
    %14 = vector.load %arg3[%c2_18, %c0_19, %c0_20] : memref<8x32x4xf32, #tpu.memory_space<vmem>>, vector<1x32x4xf32>
    %15 = vector.shape_cast %14 : vector<1x32x4xf32> to vector<32x4xf32>
    %cst_21 = arith.constant dense<0.000000e+00> : vector<32x4xf32>
    %16 = tpu.matmul %15, %13, %cst_21 {dimension_numbers = #tpu.dot_dimension_numbers<[1], [1], [0], [0], [0, 0, 1, 0], [], []>} : vector<32x4xf32>, vector<4x4xf32>, vector<32x4xf32> -> vector<32x4xf32>
    %17 = arith.addf %11, %16 : vector<32x4xf32>
    %c0_22 = arith.constant 0 : index
    %c3 = arith.constant 3 : index
    %c0_23 = arith.constant 0 : index
    %c0_24 = arith.constant 0 : index
    %18 = vector.load %arg2[%c0_22, %c3, %c0_23, %c0_24] : memref<1x8x4x4xf32, #tpu.memory_space<vmem>>, vector<1x1x4x4xf32>
    %19 = vector.shape_cast %18 : vector<1x1x4x4xf32> to vector<4x4xf32>
    %c3_25 = arith.constant 3 : index
    %c0_26 = arith.constant 0 : index
    %c0_27 = arith.constant 0 : index
    %20 = vector.load %arg3[%c3_25, %c0_26, %c0_27] : memref<8x32x4xf32, #tpu.memory_space<vmem>>, vector<1x32x4xf32>
    %21 = vector.shape_cast %20 : vector<1x32x4xf32> to vector<32x4xf32>
    %cst_28 = arith.constant dense<0.000000e+00> : vector<32x4xf32>
    %22 = tpu.matmul %21, %19, %cst_28 {dimension_numbers = #tpu.dot_dimension_numbers<[1], [1], [0], [0], [0, 0, 1, 0], [], []>} : vector<32x4xf32>, vector<4x4xf32>, vector<32x4xf32> -> vector<32x4xf32>
    %23 = arith.addf %17, %22 : vector<32x4xf32>
    %c0_29 = arith.constant 0 : index
    %c4 = arith.constant 4 : index
    %c0_30 = arith.constant 0 : index
    %c0_31 = arith.constant 0 : index
    %24 = vector.load %arg2[%c0_29, %c4, %c0_30, %c0_31] : memref<1x8x4x4xf32, #tpu.memory_space<vmem>>, vector<1x1x4x4xf32>
    %25 = vector.shape_cast %24 : vector<1x1x4x4xf32> to vector<4x4xf32>
    %c4_32 = arith.constant 4 : index
    %c0_33 = arith.constant 0 : index
    %c0_34 = arith.constant 0 : index
    %26 = vector.load %arg3[%c4_32, %c0_33, %c0_34] : memref<8x32x4xf32, #tpu.memory_space<vmem>>, vector<1x32x4xf32>
    %27 = vector.shape_cast %26 : vector<1x32x4xf32> to vector<32x4xf32>
    %cst_35 = arith.constant dense<0.000000e+00> : vector<32x4xf32>
    %28 = tpu.matmul %27, %25, %cst_35 {dimension_numbers = #tpu.dot_dimension_numbers<[1], [1], [0], [0], [0, 0, 1, 0], [], []>} : vector<32x4xf32>, vector<4x4xf32>, vector<32x4xf32> -> vector<32x4xf32>
    %29 = arith.addf %23, %28 : vector<32x4xf32>
    %c0_36 = arith.constant 0 : index
    %c5 = arith.constant 5 : index
    %c0_37 = arith.constant 0 : index
    %c0_38 = arith.constant 0 : index
    %30 = vector.load %arg2[%c0_36, %c5, %c0_37, %c0_38] : memref<1x8x4x4xf32, #tpu.memory_space<vmem>>, vector<1x1x4x4xf32>
    %31 = vector.shape_cast %30 : vector<1x1x4x4xf32> to vector<4x4xf32>
    %c5_39 = arith.constant 5 : index
    %c0_40 = arith.constant 0 : index
    %c0_41 = arith.constant 0 : index
    %32 = vector.load %arg3[%c5_39, %c0_40, %c0_41] : memref<8x32x4xf32, #tpu.memory_space<vmem>>, vector<1x32x4xf32>
    %33 = vector.shape_cast %32 : vector<1x32x4xf32> to vector<32x4xf32>
    %cst_42 = arith.constant dense<0.000000e+00> : vector<32x4xf32>
    %34 = tpu.matmul %33, %31, %cst_42 {dimension_numbers = #tpu.dot_dimension_numbers<[1], [1], [0], [0], [0, 0, 1, 0], [], []>} : vector<32x4xf32>, vector<4x4xf32>, vector<32x4xf32> -> vector<32x4xf32>
    %35 = arith.addf %29, %34 : vector<32x4xf32>
    %c0_43 = arith.constant 0 : index
    %c6 = arith.constant 6 : index
    %c0_44 = arith.constant 0 : index
    %c0_45 = arith.constant 0 : index
    %36 = vector.load %arg2[%c0_43, %c6, %c0_44, %c0_45] : memref<1x8x4x4xf32, #tpu.memory_space<vmem>>, vector<1x1x4x4xf32>
    %37 = vector.shape_cast %36 : vector<1x1x4x4xf32> to vector<4x4xf32>
    %c6_46 = arith.constant 6 : index
    %c0_47 = arith.constant 0 : index
    %c0_48 = arith.constant 0 : index
    %38 = vector.load %arg3[%c6_46, %c0_47, %c0_48] : memref<8x32x4xf32, #tpu.memory_space<vmem>>, vector<1x32x4xf32>
    %39 = vector.shape_cast %38 : vector<1x32x4xf32> to vector<32x4xf32>
    %cst_49 = arith.constant dense<0.000000e+00> : vector<32x4xf32>
    %40 = tpu.matmul %39, %37, %cst_49 {dimension_numbers = #tpu.dot_dimension_numbers<[1], [1], [0], [0], [0, 0, 1, 0], [], []>} : vector<32x4xf32>, vector<4x4xf32>, vector<32x4xf32> -> vector<32x4xf32>
    %41 = arith.addf %35, %40 : vector<32x4xf32>
    %c0_50 = arith.constant 0 : index
    %c7 = arith.constant 7 : index
    %c0_51 = arith.constant 0 : index
    %c0_52 = arith.constant 0 : index
    %42 = vector.load %arg2[%c0_50, %c7, %c0_51, %c0_52] : memref<1x8x4x4xf32, #tpu.memory_space<vmem>>, vector<1x1x4x4xf32>
    %43 = vector.shape_cast %42 : vector<1x1x4x4xf32> to vector<4x4xf32>
    %c7_53 = arith.constant 7 : index
    %c0_54 = arith.constant 0 : index
    %c0_55 = arith.constant 0 : index
    %44 = vector.load %arg3[%c7_53, %c0_54, %c0_55] : memref<8x32x4xf32, #tpu.memory_space<vmem>>, vector<1x32x4xf32>
    %45 = vector.shape_cast %44 : vector<1x32x4xf32> to vector<32x4xf32>
    %cst_56 = arith.constant dense<0.000000e+00> : vector<32x4xf32>
    %46 = tpu.matmul %45, %43, %cst_56 {dimension_numbers = #tpu.dot_dimension_numbers<[1], [1], [0], [0], [0, 0, 1, 0], [], []>} : vector<32x4xf32>, vector<4x4xf32>, vector<32x4xf32> -> vector<32x4xf32>
    %47 = arith.addf %41, %46 : vector<32x4xf32>
    %48 = vector.broadcast %0 : vector<32x1xf32> to vector<32x4xf32>
    %49 = arith.addf %47, %48 : vector<32x4xf32>
    %c0_57 = arith.constant 0 : index
    %c0_58 = arith.constant 0 : index
    %c0_59 = arith.constant 0 : index
    %50 = vector.load %arg5[%c0_57, %c0_58, %c0_59] : memref<1x32x4xf32, #tpu.memory_space<vmem>>, vector<1x32x4xf32>
    %51 = vector.shape_cast %50 : vector<1x32x4xf32> to vector<32x4xf32>
    %52 = vector.shape_cast %49 : vector<32x4xf32> to vector<1x32x4xf32>
    tpu.vector_store %arg5[%c0_57, %c0_58, %c0_59], %52 {strides = array<i32>} : memref<1x32x4xf32, #tpu.memory_space<vmem>>, vector<1x32x4xf32>,
    return
  }
  func.func @transform_0(%arg0: i32, %arg1: i32) -> (i32, i32, i32, i32) {
    %c0_i32 = arith.constant 0 : i32
    %c0_i32_0 = arith.constant 0 : i32
    %c0_i32_1 = arith.constant 0 : i32
    return %arg0, %c0_i32, %arg1, %c0_i32_0 : i32, i32, i32, i32
  }
  func.func @transform_1(%arg0: i32, %arg1: i32) -> (i32, i32, i32) {
    %c0_i32 = arith.constant 0 : i32
    %c0_i32_0 = arith.constant 0 : i32
    %c0_i32_1 = arith.constant 0 : i32
    %c0_i32_2 = arith.constant 0 : i32
    return %c0_i32, %c0_i32_0, %c0_i32_1 : i32, i32, i32
  }
  func.func @transform_2(%arg0: i32, %arg1: i32) -> (i32, i32) {
    %c0_i32 = arith.constant 0 : i32
    %c0_i32_0 = arith.constant 0 : i32
    %c0_i32_1 = arith.constant 0 : i32
    return %c0_i32, %c0_i32_0 : i32, i32
  }
  func.func @transform_3(%arg0: i32, %arg1: i32) -> (i32, i32, i32) {
    %c0_i32 = arith.constant 0 : i32
    %c0_i32_0 = arith.constant 0 : i32
    return %arg0, %c0_i32, %arg1 : i32, i32, i32
  }
}

</mosaic_0001>

<llo_original>
// kernel: cond_patch_embedding.1
$region0: #{cond_patch_embedding.1}
  #allocation0 [shape = 'u32[]', space=smem, size = 0x4, offset = 0x4, fixed_abs, tag = 'smem constant byte address 0x4 - core index']
  #allocation1 [shape = 'u32[144,128]{1,0:T(1,128)}', space=vmem, size = 0x12000, scoped, tag = 'internal scratch']
  %s0 = inlined_call_operand.vmem [shape: f32[2,8,4,4], index: 0, kind: input, shape index: {}]
  %s1 = inlined_call_operand.vmem [shape: f32[8,32,4], index: 1, kind: input, shape index: {}]
  %s2 = inlined_call_operand.vmem [shape: f32[32,1], index: 2, kind: input, shape index: {}]
  %s3 = inlined_call_operand.vmem [shape: f32[2,32,4], index: 3, kind: output, shape index: {}]
  %s4 = sld [smem:[#allocation0]]
  $region45: #{cond_patch_embedding.1} parent=0
    _
  %s6 = ssub.s32 1, %s4
  %s7 = scalar_select 0, %s6, %s4
  loop: start=0, step=1, limit=4
  $region2: #{cond_patch_embedding.1} parent=0 // loop_pre_header
    _
  $region3: #{cond_patch_embedding.1} parent=0 // loop_header
    %s9 = sphi 0, %s13
    %p10 = scmp.ge.s32.totalorder %s9, 4
    %s16 = sphi 0, %s28
    %s17 = sphi 0, %s24
    %s18 = sphi 0, %s16
    %s19 = sphi 0, %s17
    %s20 = sphi 0, %s18
    %s21 = sphi 0, %s19
    %s33 = sphi 0, %s35
    %s36 = sphi 0, %s33
    %s37 = sphi 0, %s36
    %s53 = sphi 0, %s37
    %s57 = sphi 0, %s57
    %s59 = sphi 0, %s57
    %s60 = sphi 0, %s59
    %s74 = sphi 0, %s60
    %s78 = sphi 0, %s78
    %s80 = sphi 0, %s78
    %s81 = sphi 0, %s80
    %s95 = sphi 0, %s81
    %s103 = sphi 0, %s105
    %s106 = sphi 0, %s103
    %s107 = sphi 0, %s106
    %s123 = sphi 0, %s107
  $region4: #{cond_patch_embedding.1} parent=0 // loop_header_branch
    %12 = sbr.rel (%p10) target = $region8
  $region5: #{cond_patch_embedding.1} parent=0 // loop_body
    %s14 = ssub.s32 %s9, 1
    %s15 = ssub.s32 %s9, 2
    %s22 = sadd.s32 1, %s17
    %p23 = scmp.ge.s32.totalorder %s22, 1
    %s24 = scalar_select %p23, 0, %s22
    %s25 = sadd.s32 1, %s16
    %s26 = scalar_select %p23, %s25, %s16
    %p27 = scmp.ge.s32.totalorder %s26, 2
    %s28 = scalar_select %p27, 0, %s26
    %s29 = ssub.s32 %s16, %s28
    %s30 = ssub.s32 %s17, %s24
    %s31 = sor.u32 %s29, %s30
    %p32 = scmp.eq.s32.totalorder %s31, 0
    %s34 = sadd.s32 %s33, 1
    %s35 = scalar_select %p32, %s33, %s34
    %p38 = pneg %p32
    %p39 = scmp.eq.s32.totalorder %s9, 1
    %p40 = por %p38, %p39
    %p41 = scmp.ne.s32.totalorder %s33, %s36
    %p42 = scmp.eq.s32.totalorder %s9, 0
    %p43 = por %p41, %p42
    %p44 = scmp.ne.s32.totalorder %s33, %s36
    %p45 = scmp.eq.s32.totalorder %s14, 1
    %p46 = por %p44, %p45
    %p47 = scmp.ne.s32.totalorder %s36, %s37
    %p48 = scmp.eq.s32.totalorder %s14, 0
    %p49 = por %p47, %p48
    %p50 = scmp.ne.s32.totalorder %s36, %s37
    %p51 = scmp.eq.s32.totalorder %s15, 1
    %p52 = por %p50, %p51
    %p54 = scmp.ne.s32.totalorder %s37, %s53
    %p55 = scmp.eq.s32.totalorder %s15, 0
    %p56 = por %p54, %p55
    %s58 = sadd.s32 %s57, 1
    %p61 = scmp.eq.s32.totalorder %s9, 1
    %p62 = scmp.ne.s32.totalorder %s57, %s59
    %p63 = scmp.eq.s32.totalorder %s9, 0
    %p64 = por %p62, %p63
    %p65 = scmp.ne.s32.totalorder %s57, %s59
    %p66 = scmp.eq.s32.totalorder %s14, 1
    %p67 = por %p65, %p66
    %p68 = scmp.ne.s32.totalorder %s59, %s60
    %p69 = scmp.eq.s32.totalorder %s14, 0
    %p70 = por %p68, %p69
    %p71 = scmp.ne.s32.totalorder %s59, %s60
    %p72 = scmp.eq.s32.totalorder %s15, 1
    %p73 = por %p71, %p72
    %p75 = scmp.ne.s32.totalorder %s60, %s74
    %p76 = scmp.eq.s32.totalorder %s15, 0
    %p77 = por %p75, %p76
    %s79 = sadd.s32 %s78, 1
    %p82 = scmp.eq.s32.totalorder %s9, 1
    %p83 = scmp.ne.s32.totalorder %s78, %s80
    %p84 = scmp.eq.s32.totalorder %s9, 0
    %p85 = por %p83, %p84
    %p86 = scmp.ne.s32.totalorder %s78, %s80
    %p87 = scmp.eq.s32.totalorder %s14, 1
    %p88 = por %p86, %p87
    %p89 = scmp.ne.s32.totalorder %s80, %s81
    %p90 = scmp.eq.s32.totalorder %s14, 0
    %p91 = por %p89, %p90
    %p92 = scmp.ne.s32.totalorder %s80, %s81
    %p93 = scmp.eq.s32.totalorder %s15, 1
    %p94 = por %p92, %p93
    %p96 = scmp.ne.s32.totalorder %s81, %s95
    %p97 = scmp.eq.s32.totalorder %s15, 0
    %p98 = por %p96, %p97
    %s99 = ssub.s32 %s16, %s28
    %s100 = ssub.s32 %s17, %s24
    %s101 = sor.u32 %s99, %s100
    %p102 = scmp.eq.s32.totalorder %s101, 0
    %s104 = sadd.s32 %s103, 1
    %s105 = scalar_select %p102, %s103, %s104
    %p108 = pneg %p102
    %p109 = scmp.eq.s32.totalorder %s9, 1
    %p110 = por %p108, %p109
    %p111 = scmp.ne.s32.totalorder %s103, %s106
    %p112 = scmp.eq.s32.totalorder %s9, 0
    %p113 = por %p111, %p112
    %p114 = scmp.ne.s32.totalorder %s103, %s106
    %p115 = scmp.eq.s32.totalorder %s14, 1
    %p116 = por %p114, %p115
    %p117 = scmp.ne.s32.totalorder %s106, %s107
    %p118 = scmp.eq.s32.totalorder %s14, 0
    %p119 = por %p117, %p118
    %p120 = scmp.ne.s32.totalorder %s106, %s107
    %p121 = scmp.eq.s32.totalorder %s15, 1
    %p122 = por %p120, %p121
    %p124 = scmp.ne.s32.totalorder %s107, %s123
    %p125 = scmp.eq.s32.totalorder %s15, 0
    %p126 = por %p124, %p125
    %p127 = scmp.le.s32.totalorder 1, %s9
    %p128 = scmp.lt.s32.totalorder %s9, 3
    %p129 = pnand %p127, %p128
    %p130 = pneg %p129
    // Predicated region
    $region9: #{cond_patch_embedding.1} parent=5 // pred_check
      _
    $region10: #{cond_patch_embedding.1} parent=5 // pred_check_branch
      %132 = sbr.rel (%p129) target = $region12
    $region11: #{cond_patch_embedding.1} parent=5 // pred_region
      %s133 = ssub.s32 %s9, 1
      // Predicated region
      $region13: #{cond_patch_embedding.1} parent=11 // pred_check
        %p134 = pneg %p70
      $region14: #{cond_patch_embedding.1} parent=11 // pred_check_branch
        %136 = sbr.rel (%p134) target = $region16
      $region15: #{cond_patch_embedding.1} parent=11 // pred_region
        _
      $region16: #{cond_patch_embedding.1} parent=11 // pred_fallthru
        _
      // Predicated region
      $region17: #{cond_patch_embedding.1} parent=11 // pred_check
        %p137 = pneg %p91
      $region18: #{cond_patch_embedding.1} parent=11 // pred_check_branch
        %139 = sbr.rel (%p137) target = $region20
      $region19: #{cond_patch_embedding.1} parent=11 // pred_region
        _
      $region20: #{cond_patch_embedding.1} parent=11 // pred_fallthru
        _
    $region12: #{cond_patch_embedding.1} parent=5 // pred_fallthru
      _
    %p140 = scmp.lt.s32.totalorder %s9, 2
    // Predicated region
    $region21: #{cond_patch_embedding.1} parent=5 // pred_check
      %p141 = pneg %p140
    $region22: #{cond_patch_embedding.1} parent=5 // pred_check_branch
      %143 = sbr.rel (%p141) target = $region24
    $region23: #{cond_patch_embedding.1} parent=5 // pred_region
      // Predicated region
      $region25: #{cond_patch_embedding.1} parent=23 // pred_check
        %p144 = pneg %p43
      $region26: #{cond_patch_embedding.1} parent=23 // pred_check_branch
        %146 = sbr.rel (%p144) target = $region28
      $region27: #{cond_patch_embedding.1} parent=23 // pred_region
        %p147 = scmp.lt.s32.totalorder %s16, 1
        %s148 = scalar_select %p147, %s16, 1
        %p149 = scmp.lt.s32.totalorder %s17, 0
        %s150 = scalar_select %p149, %s17, 0
        %s151 = smul.addr %s148, 8
        %s152 = sadd.s32 %s150, %s151
        %s153 = smul.addr %s152, 4
        %s154 = scalar_lea.vmem %s0, %s153
      $region28: #{cond_patch_embedding.1} parent=23 // pred_fallthru
        _
    $region24: #{cond_patch_embedding.1} parent=5 // pred_fallthru
      _
    %p155 = scmp.le.s32.totalorder 1, %s9
    %p156 = scmp.lt.s32.totalorder %s9, 3
    %p157 = pnand %p155, %p156
    %p158 = pneg %p157
    // Predicated region
    $region29: #{cond_patch_embedding.1} parent=5 // pred_check
      _
    $region30: #{cond_patch_embedding.1} parent=5 // pred_check_branch
      %160 = sbr.rel (%p157) target = $region32
    $region31: #{cond_patch_embedding.1} parent=5 // pred_region
      %s161 = ssub.s32 %s9, 1
      %p162 = scmp.lt.s32.totalorder %s18, 1
      %s163 = scalar_select %p162, %s18, 1
      %p164 = scmp.lt.s32.totalorder %s19, 0
      %s165 = scalar_select %p164, %s19, 0
      %s166 = smul.addr %s163, 8
      %s167 = sadd.s32 %s165, %s166
      %s168 = smul.addr %s167, 4
      %s169 = scalar_lea.vmem %s0, %s168
      %p170 = pneg %p49
      %p171 = pneg %p46
      %p172 = pneg %p70
      %p173 = pneg %p67
      %p174 = pneg %p91
      %p175 = pneg %p88
      %p176 = pneg %p119
      %p177 = pneg %p116
      %p178 = scmp.lt.s32.totalorder %s18, 1
      %s179 = scalar_select %p178, %s18, 1
      %p180 = scmp.lt.s32.totalorder %s19, 0
      %s181 = scalar_select %p180, %s19, 0
      %s182 = smul.addr %s179, 4
      %s183 = sadd.s32 %s181, %s182
      %s184 = smul.addr %s183, 8
      %s185 = scalar_lea.vmem %s3, %s184
      %p186 = scmp.lt.s32.totalorder %s18, 1
      %s187 = scalar_select %p186, %s18, 1
      %p188 = scmp.lt.s32.totalorder %s19, 0
      %s189 = scalar_select %p188, %s19, 0
      %s190 = smul.addr %s187, 8
      %s191 = sadd.s32 %s189, %s190
      %s192 = smul.addr %s191, 4
      %s193 = scalar_lea.vmem %s0, %s192
      %p194 = scmp.lt.s32.totalorder %s18, 1
      %s195 = scalar_select %p194, %s18, 1
      %p196 = scmp.lt.s32.totalorder %s19, 0
      %s197 = scalar_select %p196, %s19, 0
      %s198 = smul.addr %s195, 4
      %s199 = sadd.s32 %s197, %s198
      %s200 = smul.addr %s199, 8
      %s201 = scalar_lea.vmem %s3, %s200
      %v202 = vld [vmem:[%s2] sm:$0xff]
      %v203 = vld [vmem:[%s2 + $0x8] sm:$0xff]
      %v204 = vld [vmem:[%s2 + $0x10] sm:$0xff]
      %v205 = vld [vmem:[%s2 + $0x18] sm:$0xff]
      %v206 = vld [vmem:[%s193] sm:$0xf]
      %v207 = vld [vmem:[%s1] sm:$0xff]
      %v208 = vld [vmem:[%s1 + $0x8] sm:$0xff]
      %v209 = vld [vmem:[%s1 + $0x10] sm:$0xff]
      %v210 = vld [vmem:[%s1 + $0x18] sm:$0xff]
      %s211 = scalar_lea.vmem %s193, 4
      %v212 = vld [vmem:[%s211] sm:$0xf]
      %s213 = scalar_lea.vmem %s1, 32
      %v214 = vld [vmem:[%s213] sm:$0xff]
      %v215 = vld [vmem:[%s213 + $0x8] sm:$0xff]
      %v216 = vld [vmem:[%s213 + $0x10] sm:$0xff]
      %v217 = vld [vmem:[%s213 + $0x18] sm:$0xff]
      %vm218 = vcmask 31744
      %v220 = vsel %vm218, %v214, 0
      %v223 = vsel %vm218, %v215, 0
      %v226 = vsel %vm218, %v216, 0
      %v229 = vsel %vm218, %v217, 0
      %v232 = vsel %vm218, %v212, 0
      %234 = vmatprep.subr.mxu0 0.0
      %235 = vmatpush1.xpose.msra.mxu0 0.0
      %236 = vmatprep.subr.mxu0 0.0
      %237 = vmatpush1.xpose.msra.mxu0 0.0
      %238 = vmatprep.subr.mxu0 0.0
      %239 = vmatpush1.xpose.msra.mxu0 0.0
      %240 = vmatprep.subr.mxu0 0.0
      %241 = vmatpush1.xpose.msra.mxu0 0.0
      %242 = vmatprep.subr.mxu0 0.0
      %243 = vmatpush1.xpose.msra.mxu0 0.0
      %244 = vmatprep.subr.mxu0 0.0
      %245 = vmatpush1.xpose.msra.mxu0 0.0
      %246 = vmatprep.subr.mxu0 0.0
      %247 = vmatpush1.xpose.msra.mxu0 0.0
      %248 = vmatprep.subr.mxu0 0.0
      %249 = vmatpush1.xpose.msra.mxu0 0.0
      %250 = vmatprep.subr.mxu0 0.0
      %251 = vmatpush1.xpose.msra.mxu0 0.0
      %252 = vmatprep.subr.mxu0 0.0
      %253 = vmatpush1.xpose.msra.mxu0 0.0
      %254 = vmatprep.subr.mxu0 0.0
      %255 = vmatpush1.xpose.msra.mxu0 0.0
      %256 = vmatprep.subr.mxu0 0.0
      %257 = vmatpush1.xpose.msra.mxu0 0.0
      %258 = vmatprep.subr.mxu0 0.0
      %259 = vmatpush1.xpose.msra.mxu0 0.0
      %260 = vmatprep.subr.mxu0 0.0
      %261 = vmatpush1.xpose.msra.mxu0 0.0
      %262 = vmatprep.subr.mxu0 0.0
      %263 = vmatpush1.xpose.msra.mxu0 0.0
      %264 = vmatprep.subr.mxu0 0.0
      %265 = vmatpush1.xpose.msra.mxu0 %v232
      %266 = vmatprep.subr.mxu0 0.0
      %267 = vmatpush2.xpose.msra.mxu0 0.0
      %268 = vmatprep.subr.mxu0 0.0
      %269 = vmatpush2.xpose.msra.mxu0 0.0
      %270 = vmatprep.subr.mxu0 0.0
      %271 = vmatpush2.xpose.msra.mxu0 0.0
      %272 = vmatprep.subr.mxu0 0.0
      %273 = vmatpush2.xpose.msra.mxu0 0.0
      %274 = vmatprep.subr.mxu0 0.0
      %275 = vmatpush2.xpose.msra.mxu0 0.0
      %276 = vmatprep.subr.mxu0 0.0
      %277 = vmatpush2.xpose.msra.mxu0 0.0
      %278 = vmatprep.subr.mxu0 0.0
      %279 = vmatpush2.xpose.msra.mxu0 0.0
      %280 = vmatprep.subr.mxu0 0.0
      %281 = vmatpush2.xpose.msra.mxu0 0.0
      %282 = vmatprep.subr.mxu0 0.0
      %283 = vmatpush2.xpose.msra.mxu0 0.0
      %284 = vmatprep.subr.mxu0 0.0
      %285 = vmatpush2.xpose.msra.mxu0 0.0
      %286 = vmatprep.subr.mxu0 0.0
      %287 = vmatpush2.xpose.msra.mxu0 0.0
      %288 = vmatprep.subr.mxu0 0.0
      %289 = vmatpush2.xpose.msra.mxu0 0.0
      %290 = vmatprep.subr.mxu0 0.0
      %291 = vmatpush2.xpose.msra.mxu0 0.0
      %292 = vmatprep.subr.mxu0 0.0
      %293 = vmatpush2.xpose.msra.mxu0 0.0
      %294 = vmatprep.subr.mxu0 0.0
      %295 = vmatpush2.xpose.msra.mxu0 0.0
      %296 = vmatprep.subr.mxu0 0.0
      %297 = vmatpush2.xpose.msra.mxu0 0.0
      %298 = vmatprep.mubr.f32.mxu0 0.0
      %299 = vmatmul.mubr.f32.gmra.mxu0 %v220
      %v300 = vpop.f32.mrf.mxu0
      %v301 = vadd.f32 0.0, %v300
      %v302 = vpop.f32.mrf.mxu0
      %303 = vmatprep.mubr.f32.mxu0 0.0
      %304 = vmatmul.mubr.f32.gmra.mxu0 %v223
      %v305 = vpop.f32.mrf.mxu0
      %v306 = vadd.f32 0.0, %v305
      %v307 = vpop.f32.mrf.mxu0
      %308 = vmatprep.mubr.f32.mxu0 0.0
      %309 = vmatmul.mubr.f32.gmra.mxu0 %v226
      %v310 = vpop.f32.mrf.mxu0
      %v311 = vadd.f32 0.0, %v310
      %v312 = vpop.f32.mrf.mxu0
      %313 = vmatprep.mubr.f32.mxu0 0.0
      %314 = vmatmul.mubr.f32.gmra.mxu0 %v229
      %v315 = vpop.f32.mrf.mxu0
      %v316 = vadd.f32 0.0, %v315
      %v317 = vpop.f32.mrf.mxu0
      %318 = vdwg.mxu0
      %v320 = vsel %vm218, %v207, 0
      %v323 = vsel %vm218, %v208, 0
      %v326 = vsel %vm218, %v209, 0
      %v329 = vsel %vm218, %v210, 0
      %v332 = vsel %vm218, %v206, 0
      %334 = vmatprep.subr.mxu0 0.0
      %335 = vmatpush1.xpose.msra.mxu0 0.0
      %336 = vmatprep.subr.mxu0 0.0
      %337 = vmatpush1.xpose.msra.mxu0 0.0
      %338 = vmatprep.subr.mxu0 0.0
      %339 = vmatpush1.xpose.msra.mxu0 0.0
      %340 = vmatprep.subr.mxu0 0.0
      %341 = vmatpush1.xpose.msra.mxu0 0.0
      %342 = vmatprep.subr.mxu0 0.0
      %343 = vmatpush1.xpose.msra.mxu0 0.0
      %344 = vmatprep.subr.mxu0 0.0
      %345 = vmatpush1.xpose.msra.mxu0 0.0
      %346 = vmatprep.subr.mxu0 0.0
      %347 = vmatpush1.xpose.msra.mxu0 0.0
      %348 = vmatprep.subr.mxu0 0.0
      %349 = vmatpush1.xpose.msra.mxu0 0.0
      %350 = vmatprep.subr.mxu0 0.0
      %351 = vmatpush1.xpose.msra.mxu0 0.0
      %352 = vmatprep.subr.mxu0 0.0
      %353 = vmatpush1.xpose.msra.mxu0 0.0
      %354 = vmatprep.subr.mxu0 0.0
      %355 = vmatpush1.xpose.msra.mxu0 0.0
      %356 = vmatprep.subr.mxu0 0.0
      %357 = vmatpush1.xpose.msra.mxu0 0.0
      %358 = vmatprep.subr.mxu0 0.0
      %359 = vmatpush1.xpose.msra.mxu0 0.0
      %360 = vmatprep.subr.mxu0 0.0
      %361 = vmatpush1.xpose.msra.mxu0 0.0
      %362 = vmatprep.subr.mxu0 0.0
      %363 = vmatpush1.xpose.msra.mxu0 0.0
      %364 = vmatprep.subr.mxu0 0.0
      %365 = vmatpush1.xpose.msra.mxu0 %v332
      %366 = vmatprep.subr.mxu0 0.0
      %367 = vmatpush2.xpose.msra.mxu0 0.0
      %368 = vmatprep.subr.mxu0 0.0
      %369 = vmatpush2.xpose.msra.mxu0 0.0
      %370 = vmatprep.subr.mxu0 0.0
      %371 = vmatpush2.xpose.msra.mxu0 0.0
      %372 = vmatprep.subr.mxu0 0.0
      %373 = vmatpush2.xpose.msra.mxu0 0.0
      %374 = vmatprep.subr.mxu0 0.0
      %375 = vmatpush2.xpose.msra.mxu0 0.0
      %376 = vmatprep.subr.mxu0 0.0
      %377 = vmatpush2.xpose.msra.mxu0 0.0
      %378 = vmatprep.subr.mxu0 0.0
      %379 = vmatpush2.xpose.msra.mxu0 0.0
      %380 = vmatprep.subr.mxu0 0.0
      %381 = vmatpush2.xpose.msra.mxu0 0.0
      %382 = vmatprep.subr.mxu0 0.0
      %383 = vmatpush2.xpose.msra.mxu0 0.0
      %384 = vmatprep.subr.mxu0 0.0
      %385 = vmatpush2.xpose.msra.mxu0 0.0
      %386 = vmatprep.subr.mxu0 0.0
      %387 = vmatpush2.xpose.msra.mxu0 0.0
      %388 = vmatprep.subr.mxu0 0.0
      %389 = vmatpush2.xpose.msra.mxu0 0.0
      %390 = vmatprep.subr.mxu0 0.0
      %391 = vmatpush2.xpose.msra.mxu0 0.0
      %392 = vmatprep.subr.mxu0 0.0
      %393 = vmatpush2.xpose.msra.mxu0 0.0
      %394 = vmatprep.subr.mxu0 0.0
      %395 = vmatpush2.xpose.msra.mxu0 0.0
      %396 = vmatprep.subr.mxu0 0.0
      %397 = vmatpush2.xpose.msra.mxu0 0.0
      %398 = vmatprep.mubr.f32.mxu0 0.0
      %399 = vmatmul.mubr.f32.gmra.mxu0 %v320
      %v400 = vpop.f32.mrf.mxu0
      %v401 = vadd.f32 %v301, %v400
      %v402 = vpop.f32.mrf.mxu0
      %403 = vmatprep.mubr.f32.mxu0 0.0
      %404 = vmatmul.mubr.f32.gmra.mxu0 %v323
      %v405 = vpop.f32.mrf.mxu0
      %v406 = vadd.f32 %v306, %v405
      %v407 = vpop.f32.mrf.mxu0
      %408 = vmatprep.mubr.f32.mxu0 0.0
      %409 = vmatmul.mubr.f32.gmra.mxu0 %v326
      %v410 = vpop.f32.mrf.mxu0
      %v411 = vadd.f32 %v311, %v410
      %v412 = vpop.f32.mrf.mxu0
      %413 = vmatprep.mubr.f32.mxu0 0.0
      %414 = vmatmul.mubr.f32.gmra.mxu0 %v329
      %v415 = vpop.f32.mrf.mxu0
      %v416 = vadd.f32 %v316, %v415
      %v417 = vpop.f32.mrf.mxu0
      %418 = vdwg.mxu0
      %s419 = scalar_lea.vmem %s193, 8
      %v420 = vld [vmem:[%s419] sm:$0xf]
      %s421 = scalar_lea.vmem %s1, 64
      %v422 = vld [vmem:[%s421] sm:$0xff]
      %v423 = vld [vmem:[%s421 + $0x8] sm:$0xff]
      %v424 = vld [vmem:[%s421 + $0x10] sm:$0xff]
      %v425 = vld [vmem:[%s421 + $0x18] sm:$0xff]
      %v427 = vsel %vm218, %v422, 0
      %v430 = vsel %vm218, %v423, 0
      %v433 = vsel %vm218, %v424, 0
      %v436 = vsel %vm218, %v425, 0
      %v439 = vsel %vm218, %v420, 0
      %441 = vmatprep.subr.mxu0 0.0
      %442 = vmatpush1.xpose.msra.mxu0 0.0
      %443 = vmatprep.subr.mxu0 0.0
      %444 = vmatpush1.xpose.msra.mxu0 0.0
      %445 = vmatprep.subr.mxu0 0.0
      %446 = vmatpush1.xpose.msra.mxu0 0.0
      %447 = vmatprep.subr.mxu0 0.0
      %448 = vmatpush1.xpose.msra.mxu0 0.0
      %449 = vmatprep.subr.mxu0 0.0
      %450 = vmatpush1.xpose.msra.mxu0 0.0
      %451 = vmatprep.subr.mxu0 0.0
      %452 = vmatpush1.xpose.msra.mxu0 0.0
      %453 = vmatprep.subr.mxu0 0.0
      %454 = vmatpush1.xpose.msra.mxu0 0.0
      %455 = vmatprep.subr.mxu0 0.0
      %456 = vmatpush1.xpose.msra.mxu0 0.0
      %457 = vmatprep.subr.mxu0 0.0
      %458 = vmatpush1.xpose.msra.mxu0 0.0
      %459 = vmatprep.subr.mxu0 0.0
      %460 = vmatpush1.xpose.msra.mxu0 0.0
      %461 = vmatprep.subr.mxu0 0.0
      %462 = vmatpush1.xpose.msra.mxu0 0.0
      %463 = vmatprep.subr.mxu0 0.0
      %464 = vmatpush1.xpose.msra.mxu0 0.0
      %465 = vmatprep.subr.mxu0 0.0
      %466 = vmatpush1.xpose.msra.mxu0 0.0
      %467 = vmatprep.subr.mxu0 0.0
      %468 = vmatpush1.xpose.msra.mxu0 0.0
      %469 = vmatprep.subr.mxu0 0.0
      %470 = vmatpush1.xpose.msra.mxu0 0.0
      %471 = vmatprep.subr.mxu0 0.0
      %472 = vmatpush1.xpose.msra.mxu0 %v439
      %473 = vmatprep.subr.mxu0 0.0
      %474 = vmatpush2.xpose.msra.mxu0 0.0
      %475 = vmatprep.subr.mxu0 0.0
      %476 = vmatpush2.xpose.msra.mxu0 0.0
      %477 = vmatprep.subr.mxu0 0.0
      %478 = vmatpush2.xpose.msra.mxu0 0.0
      %479 = vmatprep.subr.mxu0 0.0
      %480 = vmatpush2.xpose.msra.mxu0 0.0
      %481 = vmatprep.subr.mxu0 0.0
      %482 = vmatpush2.xpose.msra.mxu0 0.0
      %483 = vmatprep.subr.mxu0 0.0
      %484 = vmatpush2.xpose.msra.mxu0 0.0
      %485 = vmatprep.subr.mxu0 0.0
      %486 = vmatpush2.xpose.msra.mxu0 0.0
      %487 = vmatprep.subr.mxu0 0.0
      %488 = vmatpush2.xpose.msra.mxu0 0.0
      %489 = vmatprep.subr.mxu0 0.0
      %490 = vmatpush2.xpose.msra.mxu0 0.0
      %491 = vmatprep.subr.mxu0 0.0
      %492 = vmatpush2.xpose.msra.mxu0 0.0
      %493 = vmatprep.subr.mxu0 0.0
      %494 = vmatpush2.xpose.msra.mxu0 0.0
      %495 = vmatprep.subr.mxu0 0.0
      %496 = vmatpush2.xpose.msra.mxu0 0.0
      %497 = vmatprep.subr.mxu0 0.0
      %498 = vmatpush2.xpose.msra.mxu0 0.0
      %499 = vmatprep.subr.mxu0 0.0
      %500 = vmatpush2.xpose.msra.mxu0 0.0
      %501 = vmatprep.subr.mxu0 0.0
      %502 = vmatpush2.xpose.msra.mxu0 0.0
      %503 = vmatprep.subr.mxu0 0.0
      %504 = vmatpush2.xpose.msra.mxu0 0.0
      %505 = vmatprep.mubr.f32.mxu0 0.0
      %506 = vmatmul.mubr.f32.gmra.mxu0 %v427
      %v507 = vpop.f32.mrf.mxu0
      %v508 = vadd.f32 0.0, %v507
      %v509 = vpop.f32.mrf.mxu0
      %510 = vmatprep.mubr.f32.mxu0 0.0
      %511 = vmatmul.mubr.f32.gmra.mxu0 %v430
      %v512 = vpop.f32.mrf.mxu0
      %v513 = vadd.f32 0.0, %v512
      %v514 = vpop.f32.mrf.mxu0
      %515 = vmatprep.mubr.f32.mxu0 0.0
      %516 = vmatmul.mubr.f32.gmra.mxu0 %v433
      %v517 = vpop.f32.mrf.mxu0
      %v518 = vadd.f32 0.0, %v517
      %v519 = vpop.f32.mrf.mxu0
      %520 = vmatprep.mubr.f32.mxu0 0.0
      %521 = vmatmul.mubr.f32.gmra.mxu0 %v436
      %v522 = vpop.f32.mrf.mxu0
      %v523 = vadd.f32 0.0, %v522
      %v524 = vpop.f32.mrf.mxu0
      %525 = vdwg.mxu0
      %v526 = vadd.f32 %v401, %v508
      %v527 = vadd.f32 %v406, %v513
      %v528 = vadd.f32 %v411, %v518
      %v529 = vadd.f32 %v416, %v523
      %s530 = scalar_lea.vmem %s193, 12
      %v531 = vld [vmem:[%s530] sm:$0xf]
      %s532 = scalar_lea.vmem %s1, 96
      %v533 = vld [vmem:[%s532] sm:$0xff]
      %v534 = vld [vmem:[%s532 + $0x8] sm:$0xff]
      %v535 = vld [vmem:[%s532 + $0x10] sm:$0xff]
      %v536 = vld [vmem:[%s532 + $0x18] sm:$0xff]
      %v538 = vsel %vm218, %v533, 0
      %v541 = vsel %vm218, %v534, 0
      %v544 = vsel %vm218, %v535, 0
      %v547 = vsel %vm218, %v536, 0
      %v550 = vsel %vm218, %v531, 0
      %552 = vmatprep.subr.mxu0 0.0
      %553 = vmatpush1.xpose.msra.mxu0 0.0
      %554 = vmatprep.subr.mxu0 0.0
      %555 = vmatpush1.xpose.msra.mxu0 0.0
      %556 = vmatprep.subr.mxu0 0.0
      %557 = vmatpush1.xpose.msra.mxu0 0.0
      %558 = vmatprep.subr.mxu0 0.0
      %559 = vmatpush1.xpose.msra.mxu0 0.0
      %560 = vmatprep.subr.mxu0 0.0
      %561 = vmatpush1.xpose.msra.mxu0 0.0
      %562 = vmatprep.subr.mxu0 0.0
      %563 = vmatpush1.xpose.msra.mxu0 0.0
      %564 = vmatprep.subr.mxu0 0.0
      %565 = vmatpush1.xpose.msra.mxu0 0.0
      %566 = vmatprep.subr.mxu0 0.0
      %567 = vmatpush1.xpose.msra.mxu0 0.0
      %568 = vmatprep.subr.mxu0 0.0
      %569 = vmatpush1.xpose.msra.mxu0 0.0
      %570 = vmatprep.subr.mxu0 0.0
      %571 = vmatpush1.xpose.msra.mxu0 0.0
      %572 = vmatprep.subr.mxu0 0.0
      %573 = vmatpush1.xpose.msra.mxu0 0.0
      %574 = vmatprep.subr.mxu0 0.0
      %575 = vmatpush1.xpose.msra.mxu0 0.0
      %576 = vmatprep.subr.mxu0 0.0
      %577 = vmatpush1.xpose.msra.mxu0 0.0
      %578 = vmatprep.subr.mxu0 0.0
      %579 = vmatpush1.xpose.msra.mxu0 0.0
      %580 = vmatprep.subr.mxu0 0.0
      %581 = vmatpush1.xpose.msra.mxu0 0.0
      %582 = vmatprep.subr.mxu0 0.0
      %583 = vmatpush1.xpose.msra.mxu0 %v550
      %584 = vmatprep.subr.mxu0 0.0
      %585 = vmatpush2.xpose.msra.mxu0 0.0
      %586 = vmatprep.subr.mxu0 0.0
      %587 = vmatpush2.xpose.msra.mxu0 0.0
      %588 = vmatprep.subr.mxu0 0.0
      %589 = vmatpush2.xpose.msra.mxu0 0.0
      %590 = vmatprep.subr.mxu0 0.0
      %591 = vmatpush2.xpose.msra.mxu0 0.0
      %592 = vmatprep.subr.mxu0 0.0
      %593 = vmatpush2.xpose.msra.mxu0 0.0
      %594 = vmatprep.subr.mxu0 0.0
      %595 = vmatpush2.xpose.msra.mxu0 0.0
      %596 = vmatprep.subr.mxu0 0.0
      %597 = vmatpush2.xpose.msra.mxu0 0.0
      %598 = vmatprep.subr.mxu0 0.0
      %599 = vmatpush2.xpose.msra.mxu0 0.0
      %600 = vmatprep.subr.mxu0 0.0
      %601 = vmatpush2.xpose.msra.mxu0 0.0
      %602 = vmatprep.subr.mxu0 0.0
      %603 = vmatpush2.xpose.msra.mxu0 0.0
      %604 = vmatprep.subr.mxu0 0.0
      %605 = vmatpush2.xpose.msra.mxu0 0.0
      %606 = vmatprep.subr.mxu0 0.0
      %607 = vmatpush2.xpose.msra.mxu0 0.0
      %608 = vmatprep.subr.mxu0 0.0
      %609 = vmatpush2.xpose.msra.mxu0 0.0
      %610 = vmatprep.subr.mxu0 0.0
      %611 = vmatpush2.xpose.msra.mxu0 0.0
      %612 = vmatprep.subr.mxu0 0.0
      %613 = vmatpush2.xpose.msra.mxu0 0.0
      %614 = vmatprep.subr.mxu0 0.0
      %615 = vmatpush2.xpose.msra.mxu0 0.0
      %616 = vmatprep.mubr.f32.mxu0 0.0
      %617 = vmatmul.mubr.f32.gmra.mxu0 %v538
      %v618 = vpop.f32.mrf.mxu0
      %v619 = vadd.f32 0.0, %v618
      %v620 = vpop.f32.mrf.mxu0
      %621 = vmatprep.mubr.f32.mxu0 0.0
      %622 = vmatmul.mubr.f32.gmra.mxu0 %v541
      %v623 = vpop.f32.mrf.mxu0
      %v624 = vadd.f32 0.0, %v623
      %v625 = vpop.f32.mrf.mxu0
      %626 = vmatprep.mubr.f32.mxu0 0.0
      %627 = vmatmul.mubr.f32.gmra.mxu0 %v544
      %v628 = vpop.f32.mrf.mxu0
      %v629 = vadd.f32 0.0, %v628
      %v630 = vpop.f32.mrf.mxu0
      %631 = vmatprep.mubr.f32.mxu0 0.0
      %632 = vmatmul.mubr.f32.gmra.mxu0 %v547
      %v633 = vpop.f32.mrf.mxu0
      %v634 = vadd.f32 0.0, %v633
      %v635 = vpop.f32.mrf.mxu0
      %636 = vdwg.mxu0
      %v637 = vadd.f32 %v526, %v619
      %v638 = vadd.f32 %v527, %v624
      %v639 = vadd.f32 %v528, %v629
      %v640 = vadd.f32 %v529, %v634
      %s641 = scalar_lea.vmem %s193, 16
      %v642 = vld [vmem:[%s641] sm:$0xf]
      %s643 = scalar_lea.vmem %s1, 128
      %v644 = vld [vmem:[%s643] sm:$0xff]
      %v645 = vld [vmem:[%s643 + $0x8] sm:$0xff]
      %v646 = vld [vmem:[%s643 + $0x10] sm:$0xff]
      %v647 = vld [vmem:[%s643 + $0x18] sm:$0xff]
      %v649 = vsel %vm218, %v644, 0
      %v652 = vsel %vm218, %v645, 0
      %v655 = vsel %vm218, %v646, 0
      %v658 = vsel %vm218, %v647, 0
      %v661 = vsel %vm218, %v642, 0
      %663 = vmatprep.subr.mxu0 0.0
      %664 = vmatpush1.xpose.msra.mxu0 0.0
      %665 = vmatprep.subr.mxu0 0.0
      %666 = vmatpush1.xpose.msra.mxu0 0.0
      %667 = vmatprep.subr.mxu0 0.0
      %668 = vmatpush1.xpose.msra.mxu0 0.0
      %669 = vmatprep.subr.mxu0 0.0
      %670 = vmatpush1.xpose.msra.mxu0 0.0
      %671 = vmatprep.subr.mxu0 0.0
      %672 = vmatpush1.xpose.msra.mxu0 0.0
      %673 = vmatprep.subr.mxu0 0.0
      %674 = vmatpush1.xpose.msra.mxu0 0.0
      %675 = vmatprep.subr.mxu0 0.0
      %676 = vmatpush1.xpose.msra.mxu0 0.0
      %677 = vmatprep.subr.mxu0 0.0
      %678 = vmatpush1.xpose.msra.mxu0 0.0
      %679 = vmatprep.subr.mxu0 0.0
      %680 = vmatpush1.xpose.msra.mxu0 0.0
      %681 = vmatprep.subr.mxu0 0.0
      %682 = vmatpush1.xpose.msra.mxu0 0.0
      %683 = vmatprep.subr.mxu0 0.0
      %684 = vmatpush1.xpose.msra.mxu0 0.0
      %685 = vmatprep.subr.mxu0 0.0
      %686 = vmatpush1.xpose.msra.mxu0 0.0
      %687 = vmatprep.subr.mxu0 0.0
      %688 = vmatpush1.xpose.msra.mxu0 0.0
      %689 = vmatprep.subr.mxu0 0.0
      %690 = vmatpush1.xpose.msra.mxu0 0.0
      %691 = vmatprep.subr.mxu0 0.0
      %692 = vmatpush1.xpose.msra.mxu0 0.0
      %693 = vmatprep.subr.mxu0 0.0
      %694 = vmatpush1.xpose.msra.mxu0 %v661
      %695 = vmatprep.subr.mxu0 0.0
      %696 = vmatpush2.xpose.msra.mxu0 0.0
      %697 = vmatprep.subr.mxu0 0.0
      %698 = vmatpush2.xpose.msra.mxu0 0.0
      %699 = vmatprep.subr.mxu0 0.0
      %700 = vmatpush2.xpose.msra.mxu0 0.0
      %701 = vmatprep.subr.mxu0 0.0
      %702 = vmatpush2.xpose.msra.mxu0 0.0
      %703 = vmatprep.subr.mxu0 0.0
      %704 = vmatpush2.xpose.msra.mxu0 0.0
      %705 = vmatprep.subr.mxu0 0.0
      %706 = vmatpush2.xpose.msra.mxu0 0.0
      %707 = vmatprep.subr.mxu0 0.0
      %708 = vmatpush2.xpose.msra.mxu0 0.0
      %709 = vmatprep.subr.mxu0 0.0
      %710 = vmatpush2.xpose.msra.mxu0 0.0
      %711 = vmatprep.subr.mxu0 0.0
      %712 = vmatpush2.xpose.msra.mxu0 0.0
      %713 = vmatprep.subr.mxu0 0.0
      %714 = vmatpush2.xpose.msra.mxu0 0.0
      %715 = vmatprep.subr.mxu0 0.0
      %716 = vmatpush2.xpose.msra.mxu0 0.0
      %717 = vmatprep.subr.mxu0 0.0
      %718 = vmatpush2.xpose.msra.mxu0 0.0
      %719 = vmatprep.subr.mxu0 0.0
      %720 = vmatpush2.xpose.msra.mxu0 0.0
      %721 = vmatprep.subr.mxu0 0.0
      %722 = vmatpush2.xpose.msra.mxu0 0.0
      %723 = vmatprep.subr.mxu0 0.0
      %724 = vmatpush2.xpose.msra.mxu0 0.0
      %725 = vmatprep.subr.mxu0 0.0
      %726 = vmatpush2.xpose.msra.mxu0 0.0
      %727 = vmatprep.mubr.f32.mxu0 0.0
      %728 = vmatmul.mubr.f32.gmra.mxu0 %v649
      %v729 = vpop.f32.mrf.mxu0
      %v730 = vadd.f32 0.0, %v729
      %v731 = vpop.f32.mrf.mxu0
      %732 = vmatprep.mubr.f32.mxu0 0.0
      %733 = vmatmul.mubr.f32.gmra.mxu0 %v652
      %v734 = vpop.f32.mrf.mxu0
      %v735 = vadd.f32 0.0, %v734
      %v736 = vpop.f32.mrf.mxu0
      %737 = vmatprep.mubr.f32.mxu0 0.0
      %738 = vmatmul.mubr.f32.gmra.mxu0 %v655
      %v739 = vpop.f32.mrf.mxu0
      %v740 = vadd.f32 0.0, %v739
      %v741 = vpop.f32.mrf.mxu0
      %742 = vmatprep.mubr.f32.mxu0 0.0
      %743 = vmatmul.mubr.f32.gmra.mxu0 %v658
      %v744 = vpop.f32.mrf.mxu0
      %v745 = vadd.f32 0.0, %v744
      %v746 = vpop.f32.mrf.mxu0
      %747 = vdwg.mxu0
      %v748 = vadd.f32 %v637, %v730
      %v749 = vadd.f32 %v638, %v735
      %v750 = vadd.f32 %v639, %v740
      %v751 = vadd.f32 %v640, %v745
      %s752 = scalar_lea.vmem %s193, 20
      %v753 = vld [vmem:[%s752] sm:$0xf]
      %s754 = scalar_lea.vmem %s1, 160
      %v755 = vld [vmem:[%s754] sm:$0xff]
      %v756 = vld [vmem:[%s754 + $0x8] sm:$0xff]
      %v757 = vld [vmem:[%s754 + $0x10] sm:$0xff]
      %v758 = vld [vmem:[%s754 + $0x18] sm:$0xff]
      %v760 = vsel %vm218, %v755, 0
      %v763 = vsel %vm218, %v756, 0
      %v766 = vsel %vm218, %v757, 0
      %v769 = vsel %vm218, %v758, 0
      %v772 = vsel %vm218, %v753, 0
      %774 = vmatprep.subr.mxu0 0.0
      %775 = vmatpush1.xpose.msra.mxu0 0.0
      %776 = vmatprep.subr.mxu0 0.0
      %777 = vmatpush1.xpose.msra.mxu0 0.0
      %778 = vmatprep.subr.mxu0 0.0
      %779 = vmatpush1.xpose.msra.mxu0 0.0
      %780 = vmatprep.subr.mxu0 0.0
      %781 = vmatpush1.xpose.msra.mxu0 0.0
      %782 = vmatprep.subr.mxu0 0.0
      %783 = vmatpush1.xpose.msra.mxu0 0.0
      %784 = vmatprep.subr.mxu0 0.0
      %785 = vmatpush1.xpose.msra.mxu0 0.0
      %786 = vmatprep.subr.mxu0 0.0
      %787 = vmatpush1.xpose.msra.mxu0 0.0
      %788 = vmatprep.subr.mxu0 0.0
      %789 = vmatpush1.xpose.msra.mxu0 0.0
      %790 = vmatprep.subr.mxu0 0.0
      %791 = vmatpush1.xpose.msra.mxu0 0.0
      %792 = vmatprep.subr.mxu0 0.0
      %793 = vmatpush1.xpose.msra.mxu0 0.0
      %794 = vmatprep.subr.mxu0 0.0
      %795 = vmatpush1.xpose.msra.mxu0 0.0
      %796 = vmatprep.subr.mxu0 0.0
      %797 = vmatpush1.xpose.msra.mxu0 0.0
      %798 = vmatprep.subr.mxu0 0.0
      %799 = vmatpush1.xpose.msra.mxu0 0.0
      %800 = vmatprep.subr.mxu0 0.0
      %801 = vmatpush1.xpose.msra.mxu0 0.0
      %802 = vmatprep.subr.mxu0 0.0
      %803 = vmatpush1.xpose.msra.mxu0 0.0
      %804 = vmatprep.subr.mxu0 0.0
      %805 = vmatpush1.xpose.msra.mxu0 %v772
      %806 = vmatprep.subr.mxu0 0.0
      %807 = vmatpush2.xpose.msra.mxu0 0.0
      %808 = vmatprep.subr.mxu0 0.0
      %809 = vmatpush2.xpose.msra.mxu0 0.0
      %810 = vmatprep.subr.mxu0 0.0
      %811 = vmatpush2.xpose.msra.mxu0 0.0
      %812 = vmatprep.subr.mxu0 0.0
      %813 = vmatpush2.xpose.msra.mxu0 0.0
      %814 = vmatprep.subr.mxu0 0.0
      %815 = vmatpush2.xpose.msra.mxu0 0.0
      %816 = vmatprep.subr.mxu0 0.0
      %817 = vmatpush2.xpose.msra.mxu0 0.0
      %818 = vmatprep.subr.mxu0 0.0
      %819 = vmatpush2.xpose.msra.mxu0 0.0
      %820 = vmatprep.subr.mxu0 0.0
      %821 = vmatpush2.xpose.msra.mxu0 0.0
      %822 = vmatprep.subr.mxu0 0.0
      %823 = vmatpush2.xpose.msra.mxu0 0.0
      %824 = vmatprep.subr.mxu0 0.0
      %825 = vmatpush2.xpose.msra.mxu0 0.0
      %826 = vmatprep.subr.mxu0 0.0
      %827 = vmatpush2.xpose.msra.mxu0 0.0
      %828 = vmatprep.subr.mxu0 0.0
      %829 = vmatpush2.xpose.msra.mxu0 0.0
      %830 = vmatprep.subr.mxu0 0.0
      %831 = vmatpush2.xpose.msra.mxu0 0.0
      %832 = vmatprep.subr.mxu0 0.0
      %833 = vmatpush2.xpose.msra.mxu0 0.0
      %834 = vmatprep.subr.mxu0 0.0
      %835 = vmatpush2.xpose.msra.mxu0 0.0
      %836 = vmatprep.subr.mxu0 0.0
      %837 = vmatpush2.xpose.msra.mxu0 0.0
      %838 = vmatprep.mubr.f32.mxu0 0.0
      %839 = vmatmul.mubr.f32.gmra.mxu0 %v760
      %v840 = vpop.f32.mrf.mxu0
      %v841 = vadd.f32 0.0, %v840
      %v842 = vpop.f32.mrf.mxu0
      %843 = vmatprep.mubr.f32.mxu0 0.0
      %844 = vmatmul.mubr.f32.gmra.mxu0 %v763
      %v845 = vpop.f32.mrf.mxu0
      %v846 = vadd.f32 0.0, %v845
      %v847 = vpop.f32.mrf.mxu0
      %848 = vmatprep.mubr.f32.mxu0 0.0
      %849 = vmatmul.mubr.f32.gmra.mxu0 %v766
      %v850 = vpop.f32.mrf.mxu0
      %v851 = vadd.f32 0.0, %v850
      %v852 = vpop.f32.mrf.mxu0
      %853 = vmatprep.mubr.f32.mxu0 0.0
      %854 = vmatmul.mubr.f32.gmra.mxu0 %v769
      %v855 = vpop.f32.mrf.mxu0
      %v856 = vadd.f32 0.0, %v855
      %v857 = vpop.f32.mrf.mxu0
      %858 = vdwg.mxu0
      %v859 = vadd.f32 %v748, %v841
      %v860 = vadd.f32 %v749, %v846
      %v861 = vadd.f32 %v750, %v851
      %v862 = vadd.f32 %v751, %v856
      %s863 = scalar_lea.vmem %s193, 24
      %v864 = vld [vmem:[%s863] sm:$0xf]
      %s865 = scalar_lea.vmem %s1, 192
      %v866 = vld [vmem:[%s865] sm:$0xff]
      %v867 = vld [vmem:[%s865 + $0x8] sm:$0xff]
      %v868 = vld [vmem:[%s865 + $0x10] sm:$0xff]
      %v869 = vld [vmem:[%s865 + $0x18] sm:$0xff]
      %v871 = vsel %vm218, %v866, 0
      %v874 = vsel %vm218, %v867, 0
      %v877 = vsel %vm218, %v868, 0
      %v880 = vsel %vm218, %v869, 0
      %v883 = vsel %vm218, %v864, 0
      %885 = vmatprep.subr.mxu0 0.0
      %886 = vmatpush1.xpose.msra.mxu0 0.0
      %887 = vmatprep.subr.mxu0 0.0
      %888 = vmatpush1.xpose.msra.mxu0 0.0
      %889 = vmatprep.subr.mxu0 0.0
      %890 = vmatpush1.xpose.msra.mxu0 0.0
      %891 = vmatprep.subr.mxu0 0.0
      %892 = vmatpush1.xpose.msra.mxu0 0.0
      %893 = vmatprep.subr.mxu0 0.0
      %894 = vmatpush1.xpose.msra.mxu0 0.0
      %895 = vmatprep.subr.mxu0 0.0
      %896 = vmatpush1.xpose.msra.mxu0 0.0
      %897 = vmatprep.subr.mxu0 0.0
      %898 = vmatpush1.xpose.msra.mxu0 0.0
      %899 = vmatprep.subr.mxu0 0.0
      %900 = vmatpush1.xpose.msra.mxu0 0.0
      %901 = vmatprep.subr.mxu0 0.0
      %902 = vmatpush1.xpose.msra.mxu0 0.0
      %903 = vmatprep.subr.mxu0 0.0
      %904 = vmatpush1.xpose.msra.mxu0 0.0
      %905 = vmatprep.subr.mxu0 0.0
      %906 = vmatpush1.xpose.msra.mxu0 0.0
      %907 = vmatprep.subr.mxu0 0.0
      %908 = vmatpush1.xpose.msra.mxu0 0.0
      %909 = vmatprep.subr.mxu0 0.0
      %910 = vmatpush1.xpose.msra.mxu0 0.0
      %911 = vmatprep.subr.mxu0 0.0
      %912 = vmatpush1.xpose.msra.mxu0 0.0
      %913 = vmatprep.subr.mxu0 0.0
      %914 = vmatpush1.xpose.msra.mxu0 0.0
      %915 = vmatprep.subr.mxu0 0.0
      %916 = vmatpush1.xpose.msra.mxu0 %v883
      %917 = vmatprep.subr.mxu0 0.0
      %918 = vmatpush2.xpose.msra.mxu0 0.0
      %919 = vmatprep.subr.mxu0 0.0
      %920 = vmatpush2.xpose.msra.mxu0 0.0
      %921 = vmatprep.subr.mxu0 0.0
      %922 = vmatpush2.xpose.msra.mxu0 0.0
      %923 = vmatprep.subr.mxu0 0.0
      %924 = vmatpush2.xpose.msra.mxu0 0.0
      %925 = vmatprep.subr.mxu0 0.0
      %926 = vmatpush2.xpose.msra.mxu0 0.0
      %927 = vmatprep.subr.mxu0 0.0
      %928 = vmatpush2.xpose.msra.mxu0 0.0
      %929 = vmatprep.subr.mxu0 0.0
      %930 = vmatpush2.xpose.msra.mxu0 0.0
      %931 = vmatprep.subr.mxu0 0.0
      %932 = vmatpush2.xpose.msra.mxu0 0.0
      %933 = vmatprep.subr.mxu0 0.0
      %934 = vmatpush2.xpose.msra.mxu0 0.0
      %935 = vmatprep.subr.mxu0 0.0
      %936 = vmatpush2.xpose.msra.mxu0 0.0
      %937 = vmatprep.subr.mxu0 0.0
      %938 = vmatpush2.xpose.msra.mxu0 0.0
      %939 = vmatprep.subr.mxu0 0.0
      %940 = vmatpush2.xpose.msra.mxu0 0.0
      %941 = vmatprep.subr.mxu0 0.0
      %942 = vmatpush2.xpose.msra.mxu0 0.0
      %943 = vmatprep.subr.mxu0 0.0
      %944 = vmatpush2.xpose.msra.mxu0 0.0
      %945 = vmatprep.subr.mxu0 0.0
      %946 = vmatpush2.xpose.msra.mxu0 0.0
      %947 = vmatprep.subr.mxu0 0.0
      %948 = vmatpush2.xpose.msra.mxu0 0.0
      %949 = vmatprep.mubr.f32.mxu0 0.0
      %950 = vmatmul.mubr.f32.gmra.mxu0 %v871
      %v951 = vpop.f32.mrf.mxu0
      %v952 = vadd.f32 0.0, %v951
      %v953 = vpop.f32.mrf.mxu0
      %954 = vmatprep.mubr.f32.mxu0 0.0
      %955 = vmatmul.mubr.f32.gmra.mxu0 %v874
      %v956 = vpop.f32.mrf.mxu0
      %v957 = vadd.f32 0.0, %v956
      %v958 = vpop.f32.mrf.mxu0
      %959 = vmatprep.mubr.f32.mxu0 0.0
      %960 = vmatmul.mubr.f32.gmra.mxu0 %v877
      %v961 = vpop.f32.mrf.mxu0
      %v962 = vadd.f32 0.0, %v961
      %v963 = vpop.f32.mrf.mxu0
      %964 = vmatprep.mubr.f32.mxu0 0.0
      %965 = vmatmul.mubr.f32.gmra.mxu0 %v880
      %v966 = vpop.f32.mrf.mxu0
      %v967 = vadd.f32 0.0, %v966
      %v968 = vpop.f32.mrf.mxu0
      %969 = vdwg.mxu0
      %v970 = vadd.f32 %v859, %v952
      %v971 = vadd.f32 %v860, %v957
      %v972 = vadd.f32 %v861, %v962
      %v973 = vadd.f32 %v862, %v967
      %s974 = scalar_lea.vmem %s193, 28
      %v975 = vld [vmem:[%s974] sm:$0xf]
      %s976 = scalar_lea.vmem %s1, 224
      %v977 = vld [vmem:[%s976] sm:$0xff]
      %v978 = vld [vmem:[%s976 + $0x8] sm:$0xff]
      %v979 = vld [vmem:[%s976 + $0x10] sm:$0xff]
      %v980 = vld [vmem:[%s976 + $0x18] sm:$0xff]
      %v982 = vsel %vm218, %v977, 0
      %v985 = vsel %vm218, %v978, 0
      %v988 = vsel %vm218, %v979, 0
      %v991 = vsel %vm218, %v980, 0
      %v994 = vsel %vm218, %v975, 0
      %996 = vmatprep.subr.mxu0 0.0
      %997 = vmatpush1.xpose.msra.mxu0 0.0
      %998 = vmatprep.subr.mxu0 0.0
      %999 = vmatpush1.xpose.msra.mxu0 0.0
      %1000 = vmatprep.subr.mxu0 0.0
      %1001 = vmatpush1.xpose.msra.mxu0 0.0
      %1002 = vmatprep.subr.mxu0 0.0
      %1003 = vmatpush1.xpose.msra.mxu0 0.0
      %1004 = vmatprep.subr.mxu0 0.0
      %1005 = vmatpush1.xpose.msra.mxu0 0.0
      %1006 = vmatprep.subr.mxu0 0.0
      %1007 = vmatpush1.xpose.msra.mxu0 0.0
      %1008 = vmatprep.subr.mxu0 0.0
      %1009 = vmatpush1.xpose.msra.mxu0 0.0
      %1010 = vmatprep.subr.mxu0 0.0
      %1011 = vmatpush1.xpose.msra.mxu0 0.0
      %1012 = vmatprep.subr.mxu0 0.0
      %1013 = vmatpush1.xpose.msra.mxu0 0.0
      %1014 = vmatprep.subr.mxu0 0.0
      %1015 = vmatpush1.xpose.msra.mxu0 0.0
      %1016 = vmatprep.subr.mxu0 0.0
      %1017 = vmatpush1.xpose.msra.mxu0 0.0
      %1018 = vmatprep.subr.mxu0 0.0
      %1019 = vmatpush1.xpose.msra.mxu0 0.0
      %1020 = vmatprep.subr.mxu0 0.0
      %1021 = vmatpush1.xpose.msra.mxu0 0.0
      %1022 = vmatprep.subr.mxu0 0.0
      %1023 = vmatpush1.xpose.msra.mxu0 0.0
      %1024 = vmatprep.subr.mxu0 0.0
      %1025 = vmatpush1.xpose.msra.mxu0 0.0
      %1026 = vmatprep.subr.mxu0 0.0
      %1027 = vmatpush1.xpose.msra.mxu0 %v994
      %1028 = vmatprep.subr.mxu0 0.0
      %1029 = vmatpush2.xpose.msra.mxu0 0.0
      %1030 = vmatprep.subr.mxu0 0.0
      %1031 = vmatpush2.xpose.msra.mxu0 0.0
      %1032 = vmatprep.subr.mxu0 0.0
      %1033 = vmatpush2.xpose.msra.mxu0 0.0
      %1034 = vmatprep.subr.mxu0 0.0
      %1035 = vmatpush2.xpose.msra.mxu0 0.0
      %1036 = vmatprep.subr.mxu0 0.0
      %1037 = vmatpush2.xpose.msra.mxu0 0.0
      %1038 = vmatprep.subr.mxu0 0.0
      %1039 = vmatpush2.xpose.msra.mxu0 0.0
      %1040 = vmatprep.subr.mxu0 0.0
      %1041 = vmatpush2.xpose.msra.mxu0 0.0
      %1042 = vmatprep.subr.mxu0 0.0
      %1043 = vmatpush2.xpose.msra.mxu0 0.0
      %1044 = vmatprep.subr.mxu0 0.0
      %1045 = vmatpush2.xpose.msra.mxu0 0.0
      %1046 = vmatprep.subr.mxu0 0.0
      %1047 = vmatpush2.xpose.msra.mxu0 0.0
      %1048 = vmatprep.subr.mxu0 0.0
      %1049 = vmatpush2.xpose.msra.mxu0 0.0
      %1050 = vmatprep.subr.mxu0 0.0
      %1051 = vmatpush2.xpose.msra.mxu0 0.0
      %1052 = vmatprep.subr.mxu0 0.0
      %1053 = vmatpush2.xpose.msra.mxu0 0.0
      %1054 = vmatprep.subr.mxu0 0.0
      %1055 = vmatpush2.xpose.msra.mxu0 0.0
      %1056 = vmatprep.subr.mxu0 0.0
      %1057 = vmatpush2.xpose.msra.mxu0 0.0
      %1058 = vmatprep.subr.mxu0 0.0
      %1059 = vmatpush2.xpose.msra.mxu0 0.0
      %1060 = vmatprep.mubr.f32.mxu0 0.0
      %1061 = vmatmul.mubr.f32.gmra.mxu0 %v982
      %v1062 = vpop.f32.mrf.mxu0
      %v1063 = vadd.f32 0.0, %v1062
      %v1064 = vpop.f32.mrf.mxu0
      %1065 = vmatprep.mubr.f32.mxu0 0.0
      %1066 = vmatmul.mubr.f32.gmra.mxu0 %v985
      %v1067 = vpop.f32.mrf.mxu0
      %v1068 = vadd.f32 0.0, %v1067
      %v1069 = vpop.f32.mrf.mxu0
      %1070 = vmatprep.mubr.f32.mxu0 0.0
      %1071 = vmatmul.mubr.f32.gmra.mxu0 %v988
      %v1072 = vpop.f32.mrf.mxu0
      %v1073 = vadd.f32 0.0, %v1072
      %v1074 = vpop.f32.mrf.mxu0
      %1075 = vmatprep.mubr.f32.mxu0 0.0
      %1076 = vmatmul.mubr.f32.gmra.mxu0 %v991
      %v1077 = vpop.f32.mrf.mxu0
      %v1078 = vadd.f32 0.0, %v1077
      %v1079 = vpop.f32.mrf.mxu0
      %1080 = vdwg.mxu0
      %v1081 = vadd.f32 %v970, %v1063
      %v1082 = vadd.f32 %v971, %v1068
      %v1083 = vadd.f32 %v972, %v1073
      %v1084 = vadd.f32 %v973, %v1078
      %1086 = vset.pattern.permute.xlu0 0
      %1087 = vperm.xlu0 %1086, %v202
      %v1088 = vpop.permute.xlu0 %1087
      %1091 = vset.pattern.permute.xlu0 0
      %1092 = vperm.xlu0 %1091, %v203
      %v1093 = vpop.permute.xlu0 %1092
      %1096 = vset.pattern.permute.xlu0 0
      %1097 = vperm.xlu0 %1096, %v204
      %v1098 = vpop.permute.xlu0 %1097
      %1101 = vset.pattern.permute.xlu0 0
      %1102 = vperm.xlu0 %1101, %v205
      %v1103 = vpop.permute.xlu0 %1102
      %v1105 = vadd.f32 %v1081, %v1088
      %v1106 = vadd.f32 %v1082, %v1093
      %v1107 = vadd.f32 %v1083, %v1098
      %v1108 = vadd.f32 %v1084, %v1103
      %1109 = vst.msk [vmem:[%s201] sm:$0xff] %vm218, %v1105
      %1110 = vst.msk [vmem:[%s201 + $0x8] sm:$0xff] %vm218, %v1106
      %1111 = vst.msk [vmem:[%s201 + $0x10] sm:$0xff] %vm218, %v1107
      %1112 = vst.msk [vmem:[%s201 + $0x18] sm:$0xff] %vm218, %v1108
      %p1113 = scmp.lt.s32.totalorder %s18, 1
      %s1114 = scalar_select %p1113, %s18, 1
      %p1115 = scmp.lt.s32.totalorder %s19, 0
      %s1116 = scalar_select %p1115, %s19, 0
      %s1117 = smul.addr %s1114, 4
      %s1118 = sadd.s32 %s1116, %s1117
      %s1119 = smul.addr %s1118, 8
      %s1120 = scalar_lea.vmem %s3, %s1119
      // Predicated region
      $region33: #{cond_patch_embedding.1} parent=31 // pred_check
        %p1121 = pneg %p116
      $region34: #{cond_patch_embedding.1} parent=31 // pred_check_branch
        %1123 = sbr.rel (%p1121) target = $region36
      $region35: #{cond_patch_embedding.1} parent=31 // pred_region
        _
      $region36: #{cond_patch_embedding.1} parent=31 // pred_fallthru
        _
    $region32: #{cond_patch_embedding.1} parent=5 // pred_fallthru
      _
    %p1124 = scmp.le.s32.totalorder 2, %s9
    // Predicated region
    $region37: #{cond_patch_embedding.1} parent=5 // pred_check
      %p1125 = pneg %p1124
    $region38: #{cond_patch_embedding.1} parent=5 // pred_check_branch
      %1127 = sbr.rel (%p1125) target = $region40
    $region39: #{cond_patch_embedding.1} parent=5 // pred_region
      %s1128 = ssub.s32 %s9, 2
      // Predicated region
      $region41: #{cond_patch_embedding.1} parent=39 // pred_check
        %p1129 = pneg %p122
      $region42: #{cond_patch_embedding.1} parent=39 // pred_check_branch
        %1131 = sbr.rel (%p1129) target = $region44
      $region43: #{cond_patch_embedding.1} parent=39 // pred_region
        %p1132 = scmp.lt.s32.totalorder %s20, 1
        %s1133 = scalar_select %p1132, %s20, 1
        %p1134 = scmp.lt.s32.totalorder %s21, 0
        %s1135 = scalar_select %p1134, %s21, 0
        %s1136 = smul.addr %s1133, 4
        %s1137 = sadd.s32 %s1135, %s1136
        %s1138 = smul.addr %s1137, 8
        %s1139 = scalar_lea.vmem %s3, %s1138
      $region44: #{cond_patch_embedding.1} parent=39 // pred_fallthru
        _
    $region40: #{cond_patch_embedding.1} parent=5 // pred_fallthru
      _
  $region6: #{cond_patch_embedding.1} parent=0 // loop_footer
    %s13 = sadd.s32 1, %s9
  $region7: #{cond_patch_embedding.1} parent=0 // loop_footer_branch
    %8 = sbr.rel target = $region3
  $region8: #{cond_patch_embedding.1} parent=0 // loop_exit
    _

</llo_original>
